<compile_context>
chip_gen: v7x
topology: tpu7x:2x2x1
jax: 0.10.0
libtpu: 0.0.40
codegen_flags: <defaults>
</compile_context>

<pallas_src>
import functools
import math

import numpy as np
import jax
import jax.numpy as jnp
from jax import lax
from jax.experimental import pallas as pl
from jax.experimental.pallas import tpu as pltpu


# ----------------------------------------------------------------------------
# Gaussian construction (verbatim reproduction of the module's formula).
# ----------------------------------------------------------------------------
def _normalize_params(kernel_size, sigma, dim=3):
    if isinstance(kernel_size, (int, float)):
        kernel_size = [int(kernel_size)] * dim
    else:
        kernel_size = [int(k) for k in kernel_size]
    if isinstance(sigma, (int, float)):
        sigma = [float(sigma)] * dim
    else:
        sigma = [float(s) for s in sigma]
    return kernel_size, sigma


def _gauss_1d(size, std):
    """One 1D factor of the module's kernel, normalized per axis.

    NOTE: intentionally reproduces the module's ((x - mean) / (2*std))**2 exponent
    verbatim.  Normalizing each 1D factor independently equals normalizing the
    separable 3D product, so results stay bit-comparable to the reference conv.
    """
    x = np.arange(size, dtype=np.float64)
    mean = (size - 1) / 2
    g = 1.0 / (std * math.sqrt(2 * math.pi)) * np.exp(-(((x - mean) / (2 * std)) ** 2))
    return (g / g.sum()).astype(np.float32)


def _band_matrix(g, n):
    """(n, n) matrix M with  x @ M == 'same' zero-padded 1D cross-correlation."""
    k = g.shape[0]
    p = (k - 1) // 2                       # PyTorch 'same' left pad
    m = np.zeros((n, n), np.float32)
    for i in range(n):
        for j in range(n):
            t = i - j + p
            if 0 <= t < k:
                m[i, j] = g[t]
    return m


# ----------------------------------------------------------------------------
# Kernels (no scratch, no zero-fill, MXU band matmuls everywhere possible).
# ----------------------------------------------------------------------------
def _kernel_full_fold(x_ref, bm_ref, o_ref, *, mxu_dtype):
    """Block (TB, 1, DHW): a single kron(Bd,Bh,Bw) band matmul does everything."""
    lhs = x_ref[:, 0, :].astype(mxu_dtype)                       # (TB, DHW)
    y = jnp.dot(lhs, bm_ref[...], preferred_element_type=jnp.float32)
    o_ref[:, 0, :] = y.astype(o_ref.dtype)                       # lane-dense store


def _kernel_hw_fold(x_ref, bm_ref, o_ref, *, gd, pd, mxu_dtype):
    """Block (TB, D, HW): kron(Bh,Bw) band matmul + kD-tap sum along leading D."""
    TB, D, M = x_ref.shape
    kD = len(gd)
    lhs = x_ref[...].reshape(TB * D, M).astype(mxu_dtype)
    y = jnp.dot(lhs, bm_ref[...], preferred_element_type=jnp.float32)
    y = y.reshape(TB, D, M)
    # Taps are compile-time constants; 'same' zero padding becomes compile-time
    # bounds; each output slice is written straight to o_ref (no full-slab
    # accumulator, no padded scratch, no zero-fill).
    for e in range(D):
        acc = None
        for t in range(kD):
            s = e + t - pd
            if 0 <= s < D:
                term = gd[t] * y[:, s, :]
                acc = term if acc is None else acc + term
        o_ref[:, e, :] = acc.astype(o_ref.dtype)


def _kernel_large(x_ref, bw_ref, bh_ref, o_ref, *, gd, pd, mxu_dtype):
    """Block (TB, D, H, W): W band matmul, minor-dim transpose (XLU), H band
    matmul, transpose back, kD-tap sum along leading D.  No scratch anywhere."""
    TB, D, H, W = x_ref.shape
    kD = len(gd)
    x = x_ref[...]
    # --- W pass: band matmul on the lane axis (MXU) --------------------------
    y = jnp.dot(x.reshape(TB * D * H, W).astype(mxu_dtype), bw_ref[...],
                preferred_element_type=jnp.float32)
    # --- H pass: swap the two minor dims so H sits on lanes, then band matmul.
    # Replaces the kH sublane-misaligned tap reads + re-staging of the old code.
    yt = jnp.swapaxes(y.reshape(TB * D, H, W), -1, -2)           # (TB*D, W, H)
    z = jnp.dot(yt.reshape(TB * D * W, H).astype(mxu_dtype), bh_ref[...],
                preferred_element_type=jnp.float32)
    z = jnp.swapaxes(z.reshape(TB * D, W, H), -1, -2)            # (TB*D, H, W)
    z = z.reshape(TB, D, H, W)
    # --- D pass: aligned slices along the leading (untiled) axis, one output
    # slice at a time written straight to o_ref (bounded live range). ---------
    for e in range(D):
        acc = None
        for t in range(kD):
            s = e + t - pd
            if 0 <= s < D:
                term = gd[t] * z[:, s]
                acc = term if acc is None else acc + term
        o_ref[:, e] = acc.astype(o_ref.dtype)


# ----------------------------------------------------------------------------
# Wrapper
# ----------------------------------------------------------------------------
def _vmem_capacity_bytes():
    try:
        info = pltpu.get_tpu_info()
        for attr in ("vmem_capacity_bytes", "vmem_bytes", "vmem_size_bytes"):
            v = getattr(info, attr, None)
            if v:
                return int(v)
    except Exception:
        pass
    return 64 * 1024 * 1024            # conservative fallback (v7x has the least VMEM)


def gaussian_smoothing(x, kernel_size=5, sigma=1.0, *, vmem_budget_bytes=None,
                       fold_max=512):
    """Depthwise 3D gaussian smoothing, padding='same', NCDHW input."""
    N, C, D, H, W = x.shape
    (kD, kH, kW), (sD, sH, sW) = _normalize_params(kernel_size, sigma, dim=3)
    gd, gh, gw = _gauss_1d(kD, sD), _gauss_1d(kH, sH), _gauss_1d(kW, sW)
    pd = (kD - 1) // 2

    # Native bf16 on the MXU when the input is bf16 (f32 accumulation); f32
    # otherwise so results stay tolerance-tight against the reference conv.
    mxu_dtype = jnp.bfloat16 if x.dtype == jnp.bfloat16 else jnp.float32
    mxu_bytes = jnp.dtype(mxu_dtype).itemsize
    in_bytes = jnp.dtype(x.dtype).itemsize

    bw, bh, bd = _band_matrix(gw, W), _band_matrix(gh, H), _band_matrix(gd, D)

    B = N * C
    slab = D * H * W

    # --- path selection: fold_max bounds the per-element MXU MACs (~fold size)
    # so the folded matmul stays under the HBM roofline on v5e/v6e/v7x. --------
    if D * H * W <= fold_max:
        mode, band = "full_fold", [np.kron(bd, np.kron(bh, bw))]      # (DHW, DHW)
    elif H * W <= fold_max:
        mode, band = "hw_fold", [np.kron(bh, bw)]                     # (HW, HW)
    else:
        mode, band = "large", [bw, bh]
    band = [jnp.asarray(b, dtype=mxu_dtype) for b in band]
    band_bytes = sum(int(np.prod(b.shape)) * mxu_bytes for b in band)

    # --- per-generation VMEM budget & block-batch sizing (no divisor search) --
    cap = _vmem_capacity_bytes()
    vmem_limit = int(min(0.85 * cap, 110 * 1024 * 1024))
    if vmem_budget_bytes is None:
        vmem_budget_bytes = int(0.6 * vmem_limit)      # headroom for compiler scratch
    # Per-slab VMEM: double-buffered in/out blocks + the f32 intermediates the
    # body materializes (matmul outputs, transposes, cast copies).
    per_slab = slab * (4 * in_bytes + mxu_bytes + 4 * 4)
    avail = max(vmem_budget_bytes - 2 * band_bytes, per_slab)
    TB = int(max(1, min(B, avail // per_slab)))
    if B >= 2:
        TB = min(TB, -(-B // 2))       # >= 2 grid steps (keeps both v7x TCs busy)
    grid = (pl.cdiv(B, TB),)           # partial last block is masked by Pallas

    cparams = pltpu.CompilerParams(dimension_semantics=("parallel",),
                                   vmem_limit_bytes=vmem_limit)
    taps = tuple(float(v) for v in gd)

    if mode == "full_fold":
        M = slab
        out = pl.pallas_call(
            functools.partial(_kernel_full_fold, mxu_dtype=mxu_dtype),
            out_shape=jax.ShapeDtypeStruct((B, 1, M), x.dtype),
            grid=grid,
            in_specs=[pl.BlockSpec((TB, 1, M), lambda b: (b, 0, 0)),
                      pl.BlockSpec((M, M), lambda b: (0, 0))],
            out_specs=pl.BlockSpec((TB, 1, M), lambda b: (b, 0, 0)),
            compiler_params=cparams,
        )(x.reshape(B, 1, M), band[0])
    elif mode == "hw_fold":
        M = H * W
        out = pl.pallas_call(
            functools.partial(_kernel_hw_fold, gd=taps, pd=pd, mxu_dtype=mxu_dtype),
            out_shape=jax.ShapeDtypeStruct((B, D, M), x.dtype),
            grid=grid,
            in_specs=[pl.BlockSpec((TB, D, M), lambda b: (b, 0, 0)),
                      pl.BlockSpec((M, M), lambda b: (0, 0))],
            out_specs=pl.BlockSpec((TB, D, M), lambda b: (b, 0, 0)),
            compiler_params=cparams,
        )(x.reshape(B, D, M), band[0])
    else:
        # TODO(synk): for very large W/H on v5e the dense (W,W)/(H,H) f32 band
        # matmuls can become MXU-bound; a blocked band (only the <=3 column blocks
        # each 128-row block touches) or a bf16 band would keep it memory-bound.
        out = pl.pallas_call(
            functools.partial(_kernel_large, gd=taps, pd=pd, mxu_dtype=mxu_dtype),
            out_shape=jax.ShapeDtypeStruct((B, D, H, W), x.dtype),
            grid=grid,
            in_specs=[pl.BlockSpec((TB, D, H, W), lambda b: (b, 0, 0, 0)),
                      pl.BlockSpec((W, W), lambda b: (0, 0)),
                      pl.BlockSpec((H, H), lambda b: (0, 0))],
            out_specs=pl.BlockSpec((TB, D, H, W), lambda b: (b, 0, 0, 0)),
            compiler_params=cparams,
        )(x.reshape(B, D, H, W), band[0], band[1])

    return out.reshape(N, C, D, H, W)


# ----------------------------------------------------------------------------
# Reference (plain JAX depthwise conv3d with the module's non-separable kernel)
# ----------------------------------------------------------------------------
def _reference(x, kernel_size, sigma):
    ks, sg = _normalize_params(kernel_size, sigma, dim=3)
    grids = np.meshgrid(*[np.arange(s, dtype=np.float64) for s in ks], indexing="ij")
    kern = np.ones((), np.float64)
    for size, std, mg in zip(ks, sg, grids):
        mean = (size - 1) / 2
        kern = kern * (1.0 / (std * math.sqrt(2 * math.pi))
                       * np.exp(-(((mg - mean) / (2 * std)) ** 2)))
    kern = (kern / kern.sum()).astype(np.float32)
    C = x.shape[1]
    wgt = jnp.broadcast_to(jnp.asarray(kern)[None, None], (C, 1) + kern.shape)
    return lax.conv_general_dilated(
        x, wgt, window_strides=(1, 1, 1), padding="SAME",
        dimension_numbers=("NCDHW", "OIDHW", "NCDHW"), feature_group_count=C)


# ----------------------------------------------------------------------------
# Self-test
# ----------------------------------------------------------------------------
if __name__ == "__main__":
    key = jax.random.PRNGKey(0)
    # Exercise all three layouts:
    #   (2,3,4,8,8)      -> fully folded single band matmul (the module's demo size)
    #   (1,3,8,8,16)     -> HW fold + D tap pass, with a masked partial last block
    #   (1,2,3,128,128)  -> large-frame path (W matmul, transpose, H matmul, D taps)
    for shp in [(2, 3, 4, 8, 8), (1, 3, 8, 8, 16), (1, 2, 3, 128, 128)]:
        key, sub = jax.random.split(key)
        x = jax.random.normal(sub, shp, dtype=jnp.float32)
        out = jax.block_until_ready(gaussian_smoothing(x, kernel_size=5, sigma=1.0))
        ref = _reference(x, 5, 1.0)
        assert out.shape == x.shape and out.dtype == x.dtype
        max_err = float(jnp.max(jnp.abs(out - ref)))
        assert np.allclose(np.asarray(out), np.asarray(ref),
                           atol=1e-4, rtol=1e-4), (shp, max_err)

    # TODO(synk): the numpy<->torch round-trip / .to(device) in forward() is
    # host-side glue with no kernel equivalent; JAX arrays are used throughout.
    print("KERNEL_OK")
</pallas_src>

<mosaic_0001>
module attributes {stable_mosaic.version = 11 : i64} {
  func.func @_kernel_full_fold(%arg0: i32, %arg1: memref<3x1x256xf32, #tpu.memory_space<vmem>>, %arg2: memref<256x256xf32, #tpu.memory_space<vmem>>, %arg3: memref<3x1x256xf32, #tpu.memory_space<vmem>>) attributes {dimension_semantics = [#tpu.dimension_semantics<parallel>], iteration_bounds = array<i64: 2>, scalar_prefetch = 0 : i64, scratch_operands = 0 : i64, tpu.core_type = #tpu.core_type<tc>, window_params = [{transform_indices = @transform_0, window_bounds = array<i64: 3, 1, 256>}, {pipeline_mode = #tpu.pipeline_mode<synchronous>, transform_indices = @transform_1, window_bounds = array<i64: 256, 256>}, {transform_indices = @transform_2, window_bounds = array<i64: 3, 1, 256>}]} {
    %c0 = arith.constant 0 : index
    %c0_0 = arith.constant 0 : index
    %c0_1 = arith.constant 0 : index
    %0 = vector.load %arg1[%c0, %c0_0, %c0_1] : memref<3x1x256xf32, #tpu.memory_space<vmem>>, vector<3x1x256xf32>
    %1 = vector.shape_cast %0 : vector<3x1x256xf32> to vector<3x256xf32>
    %c0_2 = arith.constant 0 : index
    %c0_3 = arith.constant 0 : index
    %2 = vector.load %arg2[%c0_2, %c0_3] : memref<256x256xf32, #tpu.memory_space<vmem>>, vector<256x256xf32>
    %cst = arith.constant dense<0.000000e+00> : vector<3x256xf32>
    %3 = tpu.matmul %1, %2, %cst {dimension_numbers = #tpu.dot_dimension_numbers<[1], [0], [0], [1], [0, 0, 1, 1], [], []>} : vector<3x256xf32>, vector<256x256xf32>, vector<3x256xf32> -> vector<3x256xf32>
    %c0_4 = arith.constant 0 : index
    %c0_5 = arith.constant 0 : index
    %c0_6 = arith.constant 0 : index
    %4 = vector.load %arg3[%c0_4, %c0_5, %c0_6] : memref<3x1x256xf32, #tpu.memory_space<vmem>>, vector<3x1x256xf32>
    %5 = vector.shape_cast %4 : vector<3x1x256xf32> to vector<3x256xf32>
    %6 = vector.shape_cast %3 : vector<3x256xf32> to vector<3x1x256xf32>
    tpu.vector_store %arg3[%c0_4, %c0_5, %c0_6], %6 {strides = array<i32>} : memref<3x1x256xf32, #tpu.memory_space<vmem>>, vector<3x1x256xf32>,
    return
  }
  func.func @transform_0(%arg0: i32) -> (i32, i32, i32) {
    %c0_i32 = arith.constant 0 : i32
    %c0_i32_0 = arith.constant 0 : i32
    %c0_i32_1 = arith.constant 0 : i32
    return %arg0, %c0_i32, %c0_i32_0 : i32, i32, i32
  }
  func.func @transform_1(%arg0: i32) -> (i32, i32) {
    %c0_i32 = arith.constant 0 : i32
    %c0_i32_0 = arith.constant 0 : i32
    %c0_i32_1 = arith.constant 0 : i32
    return %c0_i32, %c0_i32_0 : i32, i32
  }
  func.func @transform_2(%arg0: i32) -> (i32, i32, i32) {
    %c0_i32 = arith.constant 0 : i32
    %c0_i32_0 = arith.constant 0 : i32
    %c0_i32_1 = arith.constant 0 : i32
    return %arg0, %c0_i32, %c0_i32_0 : i32, i32, i32
  }
}

</mosaic_0001>

<llo_original>
// kernel: tpu_custom_call.1
$region0: #{tpu_custom_call.1}
  #allocation0 [shape = 'u32[]', space=smem, size = 0x4, offset = 0x4, fixed_abs, tag = 'smem constant byte address 0x4 - core index']
  #allocation1 [shape = 'u32[144,128]{1,0:T(1,128)}', space=vmem, size = 0x12000, scoped, tag = 'internal scratch']
  %s0 = inlined_call_operand.hbm [shape: f32[6,1,256], index: 0, kind: input, shape index: {}]
  %s1 = inlined_call_operand.hbm [shape: f32[256,256], index: 1, kind: input, shape index: {}]
  %s2 = inlined_call_operand.hbm [shape: f32[6,1,256], index: 2, kind: output, shape index: {}]
  %s3 = sld [smem:[#allocation0]]
  $region49: #{tpu_custom_call.1} parent=0
    _
  %s5 = ssub.s32 1, %s3
  %s6 = scalar_select 0, %s5, %s3
  $region1: #{tpu_custom_call.1} parent=0
    #allocation2 [shape = 'u8[6144]{0}', space=vmem, size = 0x1800, scoped, tag = 'input window, operand 0']
    #allocation3 [shape = 's32[2]{0}', space=sflag, size = 0x8, scoped, tag = 'scoped memory for tpu_custom_call.1']
    #allocation4 [shape = 's32[2]{0}', space=sflag, size = 0x8, scoped, tag = 'scoped memory for tpu_custom_call.1']
    #allocation5 [shape = 'u8[262144]{0}', space=vmem, size = 0x40000, scoped, tag = 'input window, operand 1, single buffered']
    #allocation6 [shape = 's32[1]{0}', space=sflag, size = 0x4, scoped, tag = 'scoped memory for tpu_custom_call.1']
    #allocation7 [shape = 'u8[6144]{0}', space=vmem, size = 0x1800, scoped, tag = 'output window, operand 0']
    %7 = vsyncpa [#allocation3], 0
    %s8 = scalar_lea.sflag [#allocation3], 1
    %9 = vsyncpa %s8, 0
    %10 = vsyncpa [#allocation6], 0
    %11 = vsyncpa [#allocation4], 0
    %s12 = scalar_lea.sflag [#allocation4], 1
    %13 = vsyncpa %s12, 0
    loop: start=0, step=1, limit=4
    $region2: #{tpu_custom_call.1} parent=1 // loop_pre_header
      _
    $region3: #{tpu_custom_call.1} parent=1 // loop_header
      %s15 = sphi 0, %s19
      %p16 = scmp.ge.s32.totalorder %s15, 4
      %s25 = sphi 0, %s27
      %s28 = sphi 0, %s25
      %s29 = sphi 0, %s28
      %s45 = sphi 0, %s29
      %s49 = sphi 0, %s49
      %s51 = sphi 0, %s49
      %s52 = sphi 0, %s51
      %s66 = sphi 0, %s52
      %s72 = sphi 0, %s74
      %s75 = sphi 0, %s72
      %s76 = sphi 0, %s75
      %s92 = sphi 0, %s76
    $region4: #{tpu_custom_call.1} parent=1 // loop_header_branch
      %18 = sbr.rel (%p16) target = $region8
    $region5: #{tpu_custom_call.1} parent=1 // loop_body
      %s20 = ssub.s32 %s15, 1
      %s21 = ssub.s32 %s15, 2
      %s22 = sadd.s32 %s15, 1
      %s23 = ssub.s32 %s15, %s22
      %p24 = scmp.eq.s32.totalorder %s23, 0
      %s26 = sadd.s32 %s25, 1
      %s27 = scalar_select %p24, %s25, %s26
      %p30 = pneg %p24
      %p31 = scmp.eq.s32.totalorder %s15, 1
      %p32 = por %p30, %p31
      %p33 = scmp.ne.s32.totalorder %s25, %s28
      %p34 = scmp.eq.s32.totalorder %s15, 0
      %p35 = por %p33, %p34
      %p36 = scmp.ne.s32.totalorder %s25, %s28
      %p37 = scmp.eq.s32.totalorder %s20, 1
      %p38 = por %p36, %p37
      %p39 = scmp.ne.s32.totalorder %s28, %s29
      %p40 = scmp.eq.s32.totalorder %s20, 0
      %p41 = por %p39, %p40
      %p42 = scmp.ne.s32.totalorder %s28, %s29
      %p43 = scmp.eq.s32.totalorder %s21, 1
      %p44 = por %p42, %p43
      %p46 = scmp.ne.s32.totalorder %s29, %s45
      %p47 = scmp.eq.s32.totalorder %s21, 0
      %p48 = por %p46, %p47
      %s50 = sadd.s32 %s49, 1
      %p53 = scmp.eq.s32.totalorder %s15, 1
      %p54 = scmp.ne.s32.totalorder %s49, %s51
      %p55 = scmp.eq.s32.totalorder %s15, 0
      %p56 = por %p54, %p55
      %p57 = scmp.ne.s32.totalorder %s49, %s51
      %p58 = scmp.eq.s32.totalorder %s20, 1
      %p59 = por %p57, %p58
      %p60 = scmp.ne.s32.totalorder %s51, %s52
      %p61 = scmp.eq.s32.totalorder %s20, 0
      %p62 = por %p60, %p61
      %p63 = scmp.ne.s32.totalorder %s51, %s52
      %p64 = scmp.eq.s32.totalorder %s21, 1
      %p65 = por %p63, %p64
      %p67 = scmp.ne.s32.totalorder %s52, %s66
      %p68 = scmp.eq.s32.totalorder %s21, 0
      %p69 = por %p67, %p68
      %s70 = ssub.s32 %s15, %s22
      %p71 = scmp.eq.s32.totalorder %s70, 0
      %s73 = sadd.s32 %s72, 1
      %s74 = scalar_select %p71, %s72, %s73
      %p77 = pneg %p71
      %p78 = scmp.eq.s32.totalorder %s15, 1
      %p79 = por %p77, %p78
      %p80 = scmp.ne.s32.totalorder %s72, %s75
      %p81 = scmp.eq.s32.totalorder %s15, 0
      %p82 = por %p80, %p81
      %p83 = scmp.ne.s32.totalorder %s72, %s75
      %p84 = scmp.eq.s32.totalorder %s20, 1
      %p85 = por %p83, %p84
      %p86 = scmp.ne.s32.totalorder %s75, %s76
      %p87 = scmp.eq.s32.totalorder %s20, 0
      %p88 = por %p86, %p87
      %p89 = scmp.ne.s32.totalorder %s75, %s76
      %p90 = scmp.eq.s32.totalorder %s21, 1
      %p91 = por %p89, %p90
      %p93 = scmp.ne.s32.totalorder %s76, %s92
      %p94 = scmp.eq.s32.totalorder %s21, 0
      %p95 = por %p93, %p94
      %p96 = scmp.le.s32.totalorder 1, %s15
      %p97 = scmp.lt.s32.totalorder %s15, 3
      %p98 = pnand %p96, %p97
      %p99 = pneg %p98
      // Predicated region
      $region9: #{tpu_custom_call.1} parent=5 // pred_check
        _
      $region10: #{tpu_custom_call.1} parent=5 // pred_check_branch
        %101 = sbr.rel (%p98) target = $region12
      $region11: #{tpu_custom_call.1} parent=5 // pred_region
        %s102 = ssub.s32 %s15, 1
        // Predicated region
        $region13: #{tpu_custom_call.1} parent=11 // pred_check
          %p103 = pneg %p62
        $region14: #{tpu_custom_call.1} parent=11 // pred_check_branch
          %105 = sbr.rel (%p103) target = $region16
        $region15: #{tpu_custom_call.1} parent=11 // pred_region
          %s107 = ssub.s32 8192, 8192
          %108 = vsyncadd [#allocation6], %s107
          %s109 = sshll.u32 [#allocation5], 4
          %s110 = int_to_ptr.vmem [resolvable:$true] %s109
          %115 = dma.hbm_to_vmem [thread:$0]  %s1, 8192, %s110, [#allocation6], 256, 256, 16
        $region16: #{tpu_custom_call.1} parent=11 // pred_fallthru
          _
      $region12: #{tpu_custom_call.1} parent=5 // pred_fallthru
        _
      %p116 = scmp.lt.s32.totalorder %s15, 2
      // Predicated region
      $region17: #{tpu_custom_call.1} parent=5 // pred_check
        %p117 = pneg %p116
      $region18: #{tpu_custom_call.1} parent=5 // pred_check_branch
        %119 = sbr.rel (%p117) target = $region20
      $region19: #{tpu_custom_call.1} parent=5 // pred_region
        // Predicated region
        $region21: #{tpu_custom_call.1} parent=19 // pred_check
          %p120 = pneg %p35
        $region22: #{tpu_custom_call.1} parent=19 // pred_check_branch
          %122 = sbr.rel (%p120) target = $region24
        $region23: #{tpu_custom_call.1} parent=19 // pred_region
          %s123 = sand.u32 %s25, 1
          %s124 = scalar_lea.sflag [#allocation3], %s123
          %s125 = sand.u32 %s25, 1
          %s126 = smul.addr %s125, 6
          %s127 = scalar_lea.vmem [#allocation2], %s126
          %s128 = smul.u32 3, %s15
          %s130 = ssub.s32 96, 96
          %131 = vsyncadd %s124, %s130
          %s132 = smul.addr %s128, 2
          %s133 = smul.addr %s132, 16
          %s134 = scalar_lea.hbm %s0, %s133
          %s135 = sshll.u32 %s127, 4
          %s136 = int_to_ptr.vmem [resolvable:$true] %s135
          %141 = dma.hbm_to_vmem [thread:$0]  %s134, 96, %s136, %s124, 32, 32, 2
        $region24: #{tpu_custom_call.1} parent=19 // pred_fallthru
          _
      $region20: #{tpu_custom_call.1} parent=5 // pred_fallthru
        _
      %p142 = scmp.le.s32.totalorder 1, %s15
      %p143 = scmp.lt.s32.totalorder %s15, 3
      %p144 = pnand %p142, %p143
      %p145 = pneg %p144
      // Predicated region
      $region25: #{tpu_custom_call.1} parent=5 // pred_check
        _
      $region26: #{tpu_custom_call.1} parent=5 // pred_check_branch
        %147 = sbr.rel (%p144) target = $region28
      $region27: #{tpu_custom_call.1} parent=5 // pred_region
        %s148 = ssub.s32 %s15, 1
        %s149 = sand.u32 %s28, 1
        %s150 = scalar_lea.sflag [#allocation3], %s149
        %s151 = sand.u32 %s28, 1
        %s152 = smul.addr %s151, 6
        %s153 = scalar_lea.vmem [#allocation2], %s152
        // Predicated region
        $region29: #{tpu_custom_call.1} parent=27 // pred_check
          %p154 = pneg %p41
        $region30: #{tpu_custom_call.1} parent=27 // pred_check_branch
          %156 = sbr.rel (%p154) target = $region32
        $region31: #{tpu_custom_call.1} parent=27 // pred_region
          %157 = dma.done %s150, 96
        $region32: #{tpu_custom_call.1} parent=27 // pred_fallthru
          _
        // Predicated region
        $region33: #{tpu_custom_call.1} parent=27 // pred_check
          %p158 = pneg %p62
        $region34: #{tpu_custom_call.1} parent=27 // pred_check_branch
          %160 = sbr.rel (%p158) target = $region36
        $region35: #{tpu_custom_call.1} parent=27 // pred_region
          %161 = dma.done [#allocation6], 8192
        $region36: #{tpu_custom_call.1} parent=27 // pred_fallthru
          _
        %s162 = sand.u32 %s28, 1
        %s163 = scalar_lea.sflag [#allocation3], %s162
        %s164 = sand.u32 %s28, 1
        %s165 = smul.addr %s164, 6
        %s166 = scalar_lea.vmem [#allocation2], %s165
        %p167 = pneg %p41
        %p168 = pneg %p38
        %p169 = pneg %p62
        %p170 = pneg %p59
        %p171 = pneg %p88
        %p172 = pneg %p85
        %s173 = sand.u32 %s75, 1
        %s174 = scalar_lea.sflag [#allocation4], %s173
        %s175 = sand.u32 %s75, 1
        %s176 = smul.addr %s175, 6
        %s177 = scalar_lea.vmem [#allocation7], %s176
        %s178 = smul.u32 3, %s20
        %s179 = smul.u32 3, %s20
        %v180 = vld [vmem:[%s153] sm:$0x3]
        %v181 = vld [vmem:[%s153 + $0x2] sm:$0x3]
        %v182 = vld [vmem:[%s153 + $0x4] sm:$0x3]
        %v183 = vld [vmem:[#allocation5] sm:$0xff]
        %v184 = vld [vmem:[#allocation5 + $0x8] sm:$0xff]
        %v185 = vld [vmem:[#allocation5 + $0x10] sm:$0xff]
        %v186 = vld [vmem:[#allocation5 + $0x18] sm:$0xff]
        %v187 = vld [vmem:[#allocation5 + $0x20] sm:$0xff]
        %v188 = vld [vmem:[#allocation5 + $0x28] sm:$0xff]
        %v189 = vld [vmem:[#allocation5 + $0x30] sm:$0xff]
        %v190 = vld [vmem:[#allocation5 + $0x38] sm:$0xff]
        %v191 = vld [vmem:[#allocation5 + $0x40] sm:$0xff]
        %v192 = vld [vmem:[#allocation5 + $0x48] sm:$0xff]
        %v193 = vld [vmem:[#allocation5 + $0x50] sm:$0xff]
        %v194 = vld [vmem:[#allocation5 + $0x58] sm:$0xff]
        %v195 = vld [vmem:[#allocation5 + $0x60] sm:$0xff]
        %v196 = vld [vmem:[#allocation5 + $0x68] sm:$0xff]
        %v197 = vld [vmem:[#allocation5 + $0x70] sm:$0xff]
        %v198 = vld [vmem:[#allocation5 + $0x78] sm:$0xff]
        %v199 = vld [vmem:[#allocation5 + $0x80] sm:$0xff]
        %v200 = vld [vmem:[#allocation5 + $0x88] sm:$0xff]
        %v201 = vld [vmem:[#allocation5 + $0x90] sm:$0xff]
        %v202 = vld [vmem:[#allocation5 + $0x98] sm:$0xff]
        %v203 = vld [vmem:[#allocation5 + $0xa0] sm:$0xff]
        %v204 = vld [vmem:[#allocation5 + $0xa8] sm:$0xff]
        %v205 = vld [vmem:[#allocation5 + $0xb0] sm:$0xff]
        %v206 = vld [vmem:[#allocation5 + $0xb8] sm:$0xff]
        %v207 = vld [vmem:[#allocation5 + $0xc0] sm:$0xff]
        %v208 = vld [vmem:[#allocation5 + $0xc8] sm:$0xff]
        %v209 = vld [vmem:[#allocation5 + $0xd0] sm:$0xff]
        %v210 = vld [vmem:[#allocation5 + $0xd8] sm:$0xff]
        %v211 = vld [vmem:[#allocation5 + $0xe0] sm:$0xff]
        %v212 = vld [vmem:[#allocation5 + $0xe8] sm:$0xff]
        %v213 = vld [vmem:[#allocation5 + $0xf0] sm:$0xff]
        %v214 = vld [vmem:[#allocation5 + $0xf8] sm:$0xff]
        %v215 = vld [vmem:[#allocation5 + $0x100] sm:$0xff]
        %v216 = vld [vmem:[#allocation5 + $0x108] sm:$0xff]
        %v217 = vld [vmem:[#allocation5 + $0x110] sm:$0xff]
        %v218 = vld [vmem:[#allocation5 + $0x118] sm:$0xff]
        %v219 = vld [vmem:[#allocation5 + $0x120] sm:$0xff]
        %v220 = vld [vmem:[#allocation5 + $0x128] sm:$0xff]
        %v221 = vld [vmem:[#allocation5 + $0x130] sm:$0xff]
        %v222 = vld [vmem:[#allocation5 + $0x138] sm:$0xff]
        %v223 = vld [vmem:[#allocation5 + $0x140] sm:$0xff]
        %v224 = vld [vmem:[#allocation5 + $0x148] sm:$0xff]
        %v225 = vld [vmem:[#allocation5 + $0x150] sm:$0xff]
        %v226 = vld [vmem:[#allocation5 + $0x158] sm:$0xff]
        %v227 = vld [vmem:[#allocation5 + $0x160] sm:$0xff]
        %v228 = vld [vmem:[#allocation5 + $0x168] sm:$0xff]
        %v229 = vld [vmem:[#allocation5 + $0x170] sm:$0xff]
        %v230 = vld [vmem:[#allocation5 + $0x178] sm:$0xff]
        %v231 = vld [vmem:[#allocation5 + $0x180] sm:$0xff]
        %v232 = vld [vmem:[#allocation5 + $0x188] sm:$0xff]
        %v233 = vld [vmem:[#allocation5 + $0x190] sm:$0xff]
        %v234 = vld [vmem:[#allocation5 + $0x198] sm:$0xff]
        %v235 = vld [vmem:[#allocation5 + $0x1a0] sm:$0xff]
        %v236 = vld [vmem:[#allocation5 + $0x1a8] sm:$0xff]
        %v237 = vld [vmem:[#allocation5 + $0x1b0] sm:$0xff]
        %v238 = vld [vmem:[#allocation5 + $0x1b8] sm:$0xff]
        %v239 = vld [vmem:[#allocation5 + $0x1c0] sm:$0xff]
        %v240 = vld [vmem:[#allocation5 + $0x1c8] sm:$0xff]
        %v241 = vld [vmem:[#allocation5 + $0x1d0] sm:$0xff]
        %v242 = vld [vmem:[#allocation5 + $0x1d8] sm:$0xff]
        %v243 = vld [vmem:[#allocation5 + $0x1e0] sm:$0xff]
        %v244 = vld [vmem:[#allocation5 + $0x1e8] sm:$0xff]
        %v245 = vld [vmem:[#allocation5 + $0x1f0] sm:$0xff]
        %v246 = vld [vmem:[#allocation5 + $0x1f8] sm:$0xff]
        %v250 = vcombine.low %v180, %v181
        %v252 = vunpack.c.l.s4 1966171168
        %v253 = vunpack.c.0.s8 %v252
        %v254 = vlaneseq
        %v255 = vshrl.u32 %v254, 7
        %v256 = vsub.s32 %v253, %v255
        %v257 = vrot.slane %v250, %v256
        %v259 = vunpack.c.l.s4 1966171168
        %v260 = vunpack.c.0.s8 %v259
        %v261 = vlaneseq
        %v262 = vshrl.u32 %v261, 7
        %v263 = vsub.s32 %v260, %v262
        %v264 = vrot.slane %v182, %v263
        %v265 = vcombine.low %v257, %v264
        %v266 = vcombine.high %v257, %v264
        %v268 = vunpack.c.l.s4 1966171168
        %v269 = vunpack.c.0.s8 %v268
        %v270 = vlaneseq
        %v271 = vshrl.u32 %v270, 7
        %v272 = vsub.s32 %v269, %v271
        %v273 = vrot.slane %v265, %v272
        %v275 = vunpack.c.l.s4 1966171168
        %v276 = vunpack.c.0.s8 %v275
        %v277 = vlaneseq
        %v278 = vshrl.u32 %v277, 7
        %v279 = vsub.s32 %v276, %v278
        %v280 = vrot.slane %v266, %v279
        %283 = vmatprep.subr.mxu0 %v184
        %284 = vmatpush1.msra.mxu0 %v183
        %285 = vmatprep.subr.mxu0 %v186
        %286 = vmatpush1.msra.mxu0 %v185
        %287 = vmatprep.subr.mxu0 %v188
        %288 = vmatpush1.msra.mxu0 %v187
        %289 = vmatprep.subr.mxu0 %v190
        %290 = vmatpush1.msra.mxu0 %v189
        %291 = vmatprep.subr.mxu0 %v192
        %292 = vmatpush1.msra.mxu0 %v191
        %293 = vmatprep.subr.mxu0 %v194
        %294 = vmatpush1.msra.mxu0 %v193
        %295 = vmatprep.subr.mxu0 %v196
        %296 = vmatpush1.msra.mxu0 %v195
        %297 = vmatprep.subr.mxu0 %v198
        %298 = vmatpush1.msra.mxu0 %v197
        %299 = vmatprep.subr.mxu0 %v200
        %300 = vmatpush1.msra.mxu0 %v199
        %301 = vmatprep.subr.mxu0 %v202
        %302 = vmatpush1.msra.mxu0 %v201
        %303 = vmatprep.subr.mxu0 %v204
        %304 = vmatpush1.msra.mxu0 %v203
        %305 = vmatprep.subr.mxu0 %v206
        %306 = vmatpush1.msra.mxu0 %v205
        %307 = vmatprep.subr.mxu0 %v208
        %308 = vmatpush1.msra.mxu0 %v207
        %309 = vmatprep.subr.mxu0 %v210
        %310 = vmatpush1.msra.mxu0 %v209
        %311 = vmatprep.subr.mxu0 %v212
        %312 = vmatpush1.msra.mxu0 %v211
        %313 = vmatprep.subr.mxu0 %v214
        %314 = vmatpush1.msra.mxu0 %v213
        %315 = vmatprep.subr.mxu0 %v216
        %316 = vmatpush1.msra.mxu0 %v215
        %317 = vmatprep.subr.mxu0 %v218
        %318 = vmatpush1.msra.mxu0 %v217
        %319 = vmatprep.subr.mxu0 %v220
        %320 = vmatpush1.msra.mxu0 %v219
        %321 = vmatprep.subr.mxu0 %v222
        %322 = vmatpush1.msra.mxu0 %v221
        %323 = vmatprep.subr.mxu0 %v224
        %324 = vmatpush1.msra.mxu0 %v223
        %325 = vmatprep.subr.mxu0 %v226
        %326 = vmatpush1.msra.mxu0 %v225
        %327 = vmatprep.subr.mxu0 %v228
        %328 = vmatpush1.msra.mxu0 %v227
        %329 = vmatprep.subr.mxu0 %v230
        %330 = vmatpush1.msra.mxu0 %v229
        %331 = vmatprep.subr.mxu0 %v232
        %332 = vmatpush1.msra.mxu0 %v231
        %333 = vmatprep.subr.mxu0 %v234
        %334 = vmatpush1.msra.mxu0 %v233
        %335 = vmatprep.subr.mxu0 %v236
        %336 = vmatpush1.msra.mxu0 %v235
        %337 = vmatprep.subr.mxu0 %v238
        %338 = vmatpush1.msra.mxu0 %v237
        %339 = vmatprep.subr.mxu0 %v240
        %340 = vmatpush1.msra.mxu0 %v239
        %341 = vmatprep.subr.mxu0 %v242
        %342 = vmatpush1.msra.mxu0 %v241
        %343 = vmatprep.subr.mxu0 %v244
        %344 = vmatpush1.msra.mxu0 %v243
        %345 = vmatprep.subr.mxu0 %v246
        %346 = vmatpush1.msra.mxu0 %v245
        %347 = vmatprep.mubr.f32.mxu0 %v280
        %348 = vmatmul.mubr.f32.gmra.mrb[0].mxu0 %v273
        %v349 = vpop.f32.mrb[0].mxu0
        %v350 = vadd.f32 0.0, %v349
        %v351 = vpop.f32.mrb[0].mxu0
        %v352 = vadd.f32 0.0, %v351
        %353 = vdwg.mxu0
        %v356 = vcombine.low %v350, %v352
        %v358 = vunpack.c.l.s4 1966171168
        %v359 = vunpack.c.0.s8 %v358
        %v360 = vlaneseq
        %v361 = vshrl.u32 %v360, 7
        %v362 = vsub.s32 %v359, %v361
        %v363 = vrot.slane %v356, %v362
        %v364 = vcombine.high %v363, %v363
        %v366 = vunpack.c.l.s4 1966171168
        %v367 = vunpack.c.0.s8 %v366
        %v368 = vlaneseq
        %v369 = vshrl.u32 %v368, 7
        %v370 = vsub.s32 %v367, %v369
        %v371 = vrot.slane %v363, %v370
        %v373 = vunpack.c.l.s4 1966171168
        %v374 = vunpack.c.0.s8 %v373
        %v375 = vlaneseq
        %v376 = vshrl.u32 %v375, 7
        %v377 = vsub.s32 %v374, %v376
        %v378 = vrot.slane %v364, %v377
        %v379 = vcombine.high %v371, %v371
        %v383 = vlaneseq
        %vm384 = vcmp.ge.s32.totalorder %v383, 0
        %vm385 = vcmp.lt.s32.totalorder %v383, 256
        %vm386 = vmand %vm384, %vm385
        %387 = vst.msk [vmem:[%s177] sm:$0x3] %vm386, %v371
        %388 = vst.msk [vmem:[%s177 + $0x2] sm:$0x3] %vm386, %v378
        %389 = vst.msk [vmem:[%s177 + $0x4] sm:$0x3] %vm386, %v379
        %s390 = sand.u32 %s75, 1
        %s391 = scalar_lea.sflag [#allocation4], %s390
        %s392 = sand.u32 %s75, 1
        %s393 = smul.addr %s392, 6
        %s394 = scalar_lea.vmem [#allocation7], %s393
        // Predicated region
        $region37: #{tpu_custom_call.1} parent=27 // pred_check
          %p395 = pneg %p85
        $region38: #{tpu_custom_call.1} parent=27 // pred_check_branch
          %397 = sbr.rel (%p395) target = $region40
        $region39: #{tpu_custom_call.1} parent=27 // pred_region
          %s398 = smul.u32 3, %s20
          %s400 = ssub.s32 96, 96
          %401 = vsyncadd %s391, %s400
          %s402 = smul.addr %s398, 2
          %s403 = smul.addr %s402, 16
          %s404 = scalar_lea.hbm %s2, %s403
          %s405 = sshll.u32 %s394, 4
          %s406 = int_to_ptr.vmem [resolvable:$true] %s405
          %411 = dma.vmem_to_hbm [thread:$0]  %s406, 96, %s404, %s391, 32, 32, 2
        $region40: #{tpu_custom_call.1} parent=27 // pred_fallthru
          _
      $region28: #{tpu_custom_call.1} parent=5 // pred_fallthru
        _
      %p412 = scmp.le.s32.totalorder 2, %s15
      // Predicated region
      $region41: #{tpu_custom_call.1} parent=5 // pred_check
        %p413 = pneg %p412
      $region42: #{tpu_custom_call.1} parent=5 // pred_check_branch
        %415 = sbr.rel (%p413) target = $region44
      $region43: #{tpu_custom_call.1} parent=5 // pred_region
        %s416 = ssub.s32 %s15, 2
        // Predicated region
        $region45: #{tpu_custom_call.1} parent=43 // pred_check
          %p417 = pneg %p91
        $region46: #{tpu_custom_call.1} parent=43 // pred_check_branch
          %419 = sbr.rel (%p417) target = $region48
        $region47: #{tpu_custom_call.1} parent=43 // pred_region
          %s420 = sand.u32 %s76, 1
          %s421 = scalar_lea.sflag [#allocation4], %s420
          %s422 = sand.u32 %s76, 1
          %s423 = smul.addr %s422, 6
          %s424 = scalar_lea.vmem [#allocation7], %s423
          %425 = dma.done %s421, 96
        $region48: #{tpu_custom_call.1} parent=43 // pred_fallthru
          _
      $region44: #{tpu_custom_call.1} parent=5 // pred_fallthru
        _
    $region6: #{tpu_custom_call.1} parent=1 // loop_footer
      %s19 = sadd.s32 1, %s15
    $region7: #{tpu_custom_call.1} parent=1 // loop_footer_branch
      %14 = sbr.rel target = $region3
    $region8: #{tpu_custom_call.1} parent=1 // loop_exit
      _
    %426 = vsyncpa [#allocation3], 1
    %s427 = scalar_lea.sflag [#allocation3], 1
    %428 = vsyncpa %s427, 1
    %429 = vsyncpa [#allocation6], 1
    %430 = vsyncpa [#allocation4], 1
    %s431 = scalar_lea.sflag [#allocation4], 1
    %432 = vsyncpa %s431, 1

</llo_original>
